<compile_context>
chip_gen: v7x
topology: tpu7x:2x2x1
jax: 0.10.0
libtpu: 0.0.40
codegen_flags: <defaults>
</compile_context>

<pallas_src>
import functools

import numpy as np
import jax
import jax.numpy as jnp
from jax.experimental import pallas as pl
from jax.experimental.pallas import tpu as pltpu


# --------------------------------------------------------------------------
# Kernel A (fast path): fused depthwise+pointwise conv, stride 1 / 'same',
# channel-major (Cout, HW) output + per-core BN statistic accumulators.
# --------------------------------------------------------------------------
def _fused_conv_stats_kernel(x_ref, wf_ref, bf_ref, mask_ref,
                             y_ref, sum_ref, sq_ref, patch_ref,
                             *, K, P, W):
    i = pl.program_id(1)                       # batch index within this core
    x2 = x_ref[0]                              # (Cin, HW)  lane-dense
    masks = mask_ref[...]                      # (K*K, HW)  0/1 border masks
    Cin, HW = x2.shape

    # Build the im2col patch matrix (K*K*Cin, HW) in VMEM using static shifted
    # slices; out-of-image taps are zeroed by the precomputed masks.
    for kh in range(K):
        for kw in range(K):
            t = kh * K + kw
            s = (kh - P) * W + (kw - P)        # flat shift of this tap
            r0 = t * Cin
            if s >= 0:
                L = HW - s
                patch_ref[r0:r0 + Cin, 0:L] = x2[:, s:HW] * masks[t:t + 1, 0:L]
                if s > 0:
                    patch_ref[r0:r0 + Cin, L:HW] = jnp.zeros((Cin, s),
                                                             jnp.float32)
            else:
                a = -s
                patch_ref[r0:r0 + Cin, a:HW] = (x2[:, 0:HW - a] *
                                                masks[t:t + 1, a:HW])
                patch_ref[r0:r0 + Cin, 0:a] = jnp.zeros((Cin, a), jnp.float32)

    # Single MXU matmul: (Cout, K*K*Cin) x (K*K*Cin, HW) -> (Cout, HW).
    out = jnp.dot(wf_ref[...], patch_ref[...],
                  preferred_element_type=jnp.float32)
    out = out + bf_ref[...]                    # (Cout, 1) broadcast over lanes
    y_ref[0] = out                             # lane-dense store (already NCHW)

    # BatchNorm batch statistics, accumulated per core (resident output block).
    @pl.when(i == 0)
    def _init():
        sum_ref[...] = jnp.zeros(sum_ref.shape, sum_ref.dtype)
        sq_ref[...] = jnp.zeros(sq_ref.shape, sq_ref.dtype)

    sum_ref[0] = sum_ref[0] + jnp.sum(out, axis=1, keepdims=True)
    sq_ref[0] = sq_ref[0] + jnp.sum(out * out, axis=1, keepdims=True)


# --------------------------------------------------------------------------
# Kernel B: BatchNorm (precomputed scale/shift) + LeakyReLU, elementwise on the
# flattened (N*Cout, HW) lane-dense view.
# --------------------------------------------------------------------------
def _bn_lrelu_kernel(y_ref, scale_ref, shift_ref, o_ref, *, slope):
    z = y_ref[...] * scale_ref[...] + shift_ref[...]
    o_ref[...] = jnp.where(z > 0, z, slope * z)


# --------------------------------------------------------------------------
# Fallback conv kernel for stride != 1 or non-'same' configurations.
# --------------------------------------------------------------------------
def _dw_pw_nhwc_kernel(xpad_ref, wd_ref, bd_ref, wp_ref, bp_ref, y_ref,
                       *, K, S, Ho, Wo, Cin):
    # TODO(synk): general stride/padding fallback keeps the NHWC layout and the
    # wrapper-side pad/transposes; only the stride-1 'same' path is optimized.
    xp = xpad_ref[0]                           # (Hp, Wp, Cin), zero padded
    wd = wd_ref[...]                           # (K, K, Cin)
    acc = jnp.zeros((Ho, Wo, Cin), jnp.float32)
    for kh in range(K):
        for kw in range(K):
            patch = jax.lax.slice(
                xp, (kh, kw, 0),
                (kh + S * (Ho - 1) + 1, kw + S * (Wo - 1) + 1, Cin),
                (S, S, 1))
            acc = acc + patch * wd[kh, kw, :][None, None, :]
    acc = acc + bd_ref[0][None, None, :]
    out = jnp.dot(acc.reshape(Ho * Wo, Cin), wp_ref[...],
                  preferred_element_type=jnp.float32) + bp_ref[0][None, :]
    y_ref[0] = out


# --------------------------------------------------------------------------
# Public wrapper (PyTorch-style NCHW in / NCHW out).
# --------------------------------------------------------------------------
def conv_bn_lrelu(x_nchw, params, *, kernel, stride, padding,
                  eps=1e-5, slope=0.01):
    """Forward pass matching the PyTorch conv_bn_LRelu module (training mode)."""
    wd, bd, wp, bp, gamma, beta = params
    N, Cin, H, W = x_nchw.shape
    Cout = wp.shape[1]
    K, S, P = kernel, stride, padding
    Ho = (H + 2 * P - K) // S + 1
    Wo = (W + 2 * P - K) // S + 1
    HW = Ho * Wo
    f32 = jnp.float32
    x32 = x_nchw.astype(f32)

    if S == 1 and Ho == H and Wo == W and K <= min(H, W):
        # ------------- fast fused path (stride-1 'same' convolution) --------
        KKC = K * K * Cin
        wf = (wd.astype(f32)[:, :, :, None] *
              wp.astype(f32)[None, None, :, :]).reshape(KKC, Cout).T  # (Cout,KKC)
        bf = (bd.astype(f32) @ wp.astype(f32) + bp.astype(f32)).reshape(Cout, 1)

        # Static validity masks per tap (computed once on host, tiny).
        ii = np.arange(H).reshape(H, 1)
        jj = np.arange(W).reshape(1, W)
        mrows = []
        for kh in range(K):
            for kw in range(K):
                dh, dw = kh - P, kw - P
                valid = ((ii + dh >= 0) & (ii + dh < H) &
                         (jj + dw >= 0) & (jj + dw < W))
                mrows.append(valid.reshape(-1))
        masks = jnp.asarray(np.stack(mrows).astype(np.float32))       # (K*K, HW)

        x_flat = x32.reshape(N, Cin, H * W)   # free NCHW view, lane-dense

        nc = 2 if N % 2 == 0 else 1           # per-core batch split (v7x)
        n_per = N // nc

        kern_a = functools.partial(_fused_conv_stats_kernel, K=K, P=P, W=W)
        flops_a = 2 * N * HW * KKC * Cout
        bytes_a = 4 * (N * Cin * HW + N * Cout * HW + K * K * HW
                       + KKC * Cout + Cout + 2 * nc * Cout)

        y, ssum, ssq = pl.pallas_call(
            kern_a,
            out_shape=(
                jax.ShapeDtypeStruct((N, Cout, HW), f32),
                jax.ShapeDtypeStruct((nc, Cout, 1), f32),
                jax.ShapeDtypeStruct((nc, Cout, 1), f32),
            ),
            grid_spec=pltpu.PrefetchScalarGridSpec(
                num_scalar_prefetch=0,
                grid=(nc, n_per),
                in_specs=[
                    pl.BlockSpec((1, Cin, HW),
                                 lambda c, i: (c * n_per + i, 0, 0)),
                    pl.BlockSpec((Cout, KKC), lambda c, i: (0, 0)),
                    pl.BlockSpec((Cout, 1), lambda c, i: (0, 0)),
                    pl.BlockSpec((K * K, HW), lambda c, i: (0, 0)),
                ],
                out_specs=(
                    pl.BlockSpec((1, Cout, HW),
                                 lambda c, i: (c * n_per + i, 0, 0)),
                    pl.BlockSpec((1, Cout, 1), lambda c, i: (c, 0, 0)),
                    pl.BlockSpec((1, Cout, 1), lambda c, i: (c, 0, 0)),
                ),
                scratch_shapes=[pltpu.VMEM((KKC, HW), jnp.float32)],
            ),
            compiler_params=pltpu.CompilerParams(
                dimension_semantics=("parallel", "arbitrary"),
                vmem_limit_bytes=32 * 1024 * 1024),
            cost_estimate=pl.CostEstimate(
                flops=flops_a, transcendentals=0, bytes_accessed=bytes_a),
        )(x_flat, wf, bf, masks)

        cnt = jnp.float32(N * HW)
        mean = jnp.sum(ssum, axis=0)[:, 0] / cnt
        ex2 = jnp.sum(ssq, axis=0)[:, 0] / cnt
    else:
        # ------------- general fallback (stride != 1 / non-'same') ----------
        # TODO(synk): generalize the fused lane-dense path to strided convs.
        x_nhwc = jnp.transpose(x32, (0, 2, 3, 1))
        xpad = jnp.pad(x_nhwc, ((0, 0), (P, P), (P, P), (0, 0)))
        Hp, Wp = H + 2 * P, W + 2 * P
        kern_g = functools.partial(_dw_pw_nhwc_kernel, K=K, S=S, Ho=Ho, Wo=Wo,
                                   Cin=Cin)
        y_nhwc = pl.pallas_call(
            kern_g,
            out_shape=jax.ShapeDtypeStruct((N, HW, Cout), f32),
            grid_spec=pltpu.PrefetchScalarGridSpec(
                num_scalar_prefetch=0,
                grid=(N,),
                in_specs=[
                    pl.BlockSpec((1, Hp, Wp, Cin), lambda n: (n, 0, 0, 0)),
                    pl.BlockSpec((K, K, Cin), lambda n: (0, 0, 0)),
                    pl.BlockSpec((1, Cin), lambda n: (0, 0)),
                    pl.BlockSpec((Cin, Cout), lambda n: (0, 0)),
                    pl.BlockSpec((1, Cout), lambda n: (0, 0)),
                ],
                out_specs=pl.BlockSpec((1, HW, Cout), lambda n: (n, 0, 0)),
            ),
            compiler_params=pltpu.CompilerParams(
                dimension_semantics=("parallel",),
                vmem_limit_bytes=32 * 1024 * 1024),
        )(xpad, wd.astype(f32), bd.reshape(1, Cin).astype(f32),
          wp.astype(f32), bp.reshape(1, Cout).astype(f32))
        y = jnp.transpose(y_nhwc, (0, 2, 1))          # (N, Cout, HW)
        cnt = jnp.float32(N * HW)
        mean = jnp.sum(y_nhwc, axis=(0, 1)) / cnt
        ex2 = jnp.sum(y_nhwc * y_nhwc, axis=(0, 1)) / cnt

    # ---- BatchNorm finalize (tiny per-channel math) -> fused scale/shift ----
    var = jnp.maximum(ex2 - mean * mean, 0.0)         # clamp: avoid NaN rsqrt
    invstd = jax.lax.rsqrt(var + eps)
    scale = gamma.astype(f32) * invstd
    shift = beta.astype(f32) - mean * scale

    # ---- BN + LeakyReLU on the flattened (N*Cout, HW) lane-dense view ------
    rows = N * Cout
    y2 = y.reshape(rows, HW)
    scale_rows = jnp.tile(scale, N).reshape(rows, 1)
    shift_rows = jnp.tile(shift, N).reshape(rows, 1)

    max_block_bytes = 4 * 1024 * 1024
    cand = (max_block_bytes // (HW * 4)) // 8 * 8
    tb = rows if (cand <= 0 or cand >= rows) else cand

    kern_b = functools.partial(_bn_lrelu_kernel, slope=slope)
    out2 = pl.pallas_call(
        kern_b,
        out_shape=jax.ShapeDtypeStruct((rows, HW), f32),
        grid_spec=pltpu.PrefetchScalarGridSpec(
            num_scalar_prefetch=0,
            grid=(pl.cdiv(rows, tb),),
            in_specs=[
                pl.BlockSpec((tb, HW), lambda r: (r, 0)),
                pl.BlockSpec((tb, 1), lambda r: (r, 0)),
                pl.BlockSpec((tb, 1), lambda r: (r, 0)),
            ],
            out_specs=pl.BlockSpec((tb, HW), lambda r: (r, 0)),
        ),
        compiler_params=pltpu.CompilerParams(
            dimension_semantics=("parallel",),
            vmem_limit_bytes=32 * 1024 * 1024),
        cost_estimate=pl.CostEstimate(
            flops=4 * rows * HW, transcendentals=0,
            bytes_accessed=8 * rows * HW + 8 * rows),
    )(y2, scale_rows, shift_rows)

    return out2.reshape(N, Cout, Ho, Wo)              # already NCHW


# --------------------------------------------------------------------------
# Pure-JAX reference mirroring the PyTorch module (training-mode BN).
# --------------------------------------------------------------------------
def _reference(x_nchw, params, *, kernel, stride, padding, eps=1e-5, slope=0.01):
    wd, bd, wp, bp, gamma, beta = params
    N, Cin, H, W = x_nchw.shape
    wd_oihw = jnp.transpose(wd, (2, 0, 1))[:, None, :, :]          # (Cin,1,K,K)
    y1 = jax.lax.conv_general_dilated(
        x_nchw, wd_oihw, (stride, stride), [(padding, padding)] * 2,
        dimension_numbers=("NCHW", "OIHW", "NCHW"),
        feature_group_count=Cin) + bd[None, :, None, None]
    wp_oihw = jnp.transpose(wp, (1, 0))[:, :, None, None]          # (Cout,Cin,1,1)
    y2 = jax.lax.conv_general_dilated(
        y1, wp_oihw, (1, 1), [(0, 0), (0, 0)],
        dimension_numbers=("NCHW", "OIHW", "NCHW")) + bp[None, :, None, None]
    mean = y2.mean(axis=(0, 2, 3), keepdims=True)
    var = y2.var(axis=(0, 2, 3), keepdims=True)
    yn = (y2 - mean) / jnp.sqrt(var + eps)
    yn = yn * gamma[None, :, None, None] + beta[None, :, None, None]
    return jnp.where(yn > 0, yn, slope * yn)


if __name__ == "__main__":
    # conv_bn_LRelu(C_in=4, C_out=8, kernel=3, stride=1, padding=1)
    N, Cin, Cout, H, W = 2, 4, 8, 16, 16
    K, S, P = 3, 1, 1

    key = jax.random.PRNGKey(0)
    k1, k2, k3, k4, k5, k6, k7 = jax.random.split(key, 7)

    x = jax.random.normal(k1, (N, Cin, H, W), dtype=jnp.float32)

    wd = 0.2 * jax.random.normal(k2, (K, K, Cin), dtype=jnp.float32)   # depthwise
    bd = 0.1 * jax.random.normal(k3, (Cin,), dtype=jnp.float32)
    wp = 0.2 * jax.random.normal(k4, (Cin, Cout), dtype=jnp.float32)   # pointwise
    bp = 0.1 * jax.random.normal(k5, (Cout,), dtype=jnp.float32)
    gamma = 1.0 + 0.1 * jax.random.normal(k6, (Cout,), dtype=jnp.float32)
    beta = 0.1 * jax.random.normal(k7, (Cout,), dtype=jnp.float32)
    params = (wd, bd, wp, bp, gamma, beta)

    out = conv_bn_lrelu(x, params, kernel=K, stride=S, padding=P)
    out = jax.block_until_ready(out)

    ref = _reference(x, params, kernel=K, stride=S, padding=P)
    assert out.shape == (N, Cout, H, W)
    assert jnp.allclose(out, ref, atol=5e-2, rtol=5e-2)

    print("KERNEL_OK")
</pallas_src>

<mosaic_0001>
module attributes {stable_mosaic.version = 11 : i64} {
  func.func @_fused_conv_stats_kernel(%arg0: i32, %arg1: i32, %arg2: memref<1x4x256xf32, #tpu.memory_space<vmem>>, %arg3: memref<8x36xf32, #tpu.memory_space<vmem>>, %arg4: memref<8x1xf32, #tpu.memory_space<vmem>>, %arg5: memref<9x256xf32, #tpu.memory_space<vmem>>, %arg6: memref<1x8x256xf32, #tpu.memory_space<vmem>>, %arg7: memref<1x8x1xf32, #tpu.memory_space<vmem>>, %arg8: memref<1x8x1xf32, #tpu.memory_space<vmem>>, %arg9: memref<36x256xf32, #tpu.memory_space<vmem>>) attributes {dimension_semantics = [#tpu.dimension_semantics<parallel>, #tpu.dimension_semantics<arbitrary>], iteration_bounds = array<i64: 2, 1>, scalar_prefetch = 0 : i64, scratch_operands = 1 : i64, tpu.core_type = #tpu.core_type<tc>, window_params = [{transform_indices = @transform_0, window_bounds = array<i64: 1, 4, 256>}, {pipeline_mode = #tpu.pipeline_mode<synchronous>, transform_indices = @transform_1, window_bounds = array<i64: 8, 36>}, {pipeline_mode = #tpu.pipeline_mode<synchronous>, transform_indices = @transform_2, window_bounds = array<i64: 8, 1>}, {pipeline_mode = #tpu.pipeline_mode<synchronous>, transform_indices = @transform_3, window_bounds = array<i64: 9, 256>}, {transform_indices = @transform_4, window_bounds = array<i64: 1, 8, 256>}, {transform_indices = @transform_5, window_bounds = array<i64: 1, 8, 1>}, {transform_indices = @transform_6, window_bounds = array<i64: 1, 8, 1>}]} {
    %c0 = arith.constant 0 : index
    %c0_0 = arith.constant 0 : index
    %c0_1 = arith.constant 0 : index
    %0 = vector.load %arg2[%c0, %c0_0, %c0_1] : memref<1x4x256xf32, #tpu.memory_space<vmem>>, vector<1x4x256xf32>
    %1 = vector.shape_cast %0 : vector<1x4x256xf32> to vector<4x256xf32>
    %c0_2 = arith.constant 0 : index
    %c0_3 = arith.constant 0 : index
    %2 = vector.load %arg5[%c0_2, %c0_3] : memref<9x256xf32, #tpu.memory_space<vmem>>, vector<9x256xf32>
    %3 = vector.extract_strided_slice %1 {offsets = [0, 0], sizes = [4, 239], strides = [1, 1]} : vector<4x256xf32> to vector<4x239xf32>
    %4 = vector.extract_strided_slice %2 {offsets = [0, 17], sizes = [1, 239], strides = [1, 1]} : vector<9x256xf32> to vector<1x239xf32>
    %5 = vector.broadcast %4 : vector<1x239xf32> to vector<4x239xf32>
    %6 = arith.mulf %3, %5 : vector<4x239xf32>
    %c0_4 = arith.constant 0 : index
    %c17 = arith.constant 17 : index
    %7 = vector.load %arg9[%c0_4, %c17] : memref<36x256xf32, #tpu.memory_space<vmem>>, vector<4x239xf32>
    tpu.vector_store %arg9[%c0_4, %c17], %6 {strides = array<i32>} : memref<36x256xf32, #tpu.memory_space<vmem>>, vector<4x239xf32>,
    %cst = arith.constant 0.000000e+00 : f32
    %8 = vector.broadcast %cst : f32 to vector<4x17xf32>
    %c0_5 = arith.constant 0 : index
    %c0_6 = arith.constant 0 : index
    %9 = vector.load %arg9[%c0_5, %c0_6] : memref<36x256xf32, #tpu.memory_space<vmem>>, vector<4x17xf32>
    tpu.vector_store %arg9[%c0_5, %c0_6], %8 {strides = array<i32>} : memref<36x256xf32, #tpu.memory_space<vmem>>, vector<4x17xf32>,
    %10 = vector.extract_strided_slice %1 {offsets = [0, 0], sizes = [4, 240], strides = [1, 1]} : vector<4x256xf32> to vector<4x240xf32>
    %11 = vector.extract_strided_slice %2 {offsets = [1, 16], sizes = [1, 240], strides = [1, 1]} : vector<9x256xf32> to vector<1x240xf32>
    %12 = vector.broadcast %11 : vector<1x240xf32> to vector<4x240xf32>
    %13 = arith.mulf %10, %12 : vector<4x240xf32>
    %c4 = arith.constant 4 : index
    %c16 = arith.constant 16 : index
    %14 = vector.load %arg9[%c4, %c16] : memref<36x256xf32, #tpu.memory_space<vmem>>, vector<4x240xf32>
    tpu.vector_store %arg9[%c4, %c16], %13 {strides = array<i32>} : memref<36x256xf32, #tpu.memory_space<vmem>>, vector<4x240xf32>,
    %cst_7 = arith.constant 0.000000e+00 : f32
    %15 = vector.broadcast %cst_7 : f32 to vector<4x16xf32>
    %c4_8 = arith.constant 4 : index
    %c0_9 = arith.constant 0 : index
    %16 = vector.load %arg9[%c4_8, %c0_9] : memref<36x256xf32, #tpu.memory_space<vmem>>, vector<4x16xf32>
    tpu.vector_store %arg9[%c4_8, %c0_9], %15 {strides = array<i32>} : memref<36x256xf32, #tpu.memory_space<vmem>>, vector<4x16xf32>,
    %17 = vector.extract_strided_slice %1 {offsets = [0, 0], sizes = [4, 241], strides = [1, 1]} : vector<4x256xf32> to vector<4x241xf32>
    %18 = vector.extract_strided_slice %2 {offsets = [2, 15], sizes = [1, 241], strides = [1, 1]} : vector<9x256xf32> to vector<1x241xf32>
    %19 = vector.broadcast %18 : vector<1x241xf32> to vector<4x241xf32>
    %20 = arith.mulf %17, %19 : vector<4x241xf32>
    %c8 = arith.constant 8 : index
    %c15 = arith.constant 15 : index
    %21 = vector.load %arg9[%c8, %c15] : memref<36x256xf32, #tpu.memory_space<vmem>>, vector<4x241xf32>
    tpu.vector_store %arg9[%c8, %c15], %20 {strides = array<i32>} : memref<36x256xf32, #tpu.memory_space<vmem>>, vector<4x241xf32>,
    %cst_10 = arith.constant 0.000000e+00 : f32
    %22 = vector.broadcast %cst_10 : f32 to vector<4x15xf32>
    %c8_11 = arith.constant 8 : index
    %c0_12 = arith.constant 0 : index
    %23 = vector.load %arg9[%c8_11, %c0_12] : memref<36x256xf32, #tpu.memory_space<vmem>>, vector<4x15xf32>
    tpu.vector_store %arg9[%c8_11, %c0_12], %22 {strides = array<i32>} : memref<36x256xf32, #tpu.memory_space<vmem>>, vector<4x15xf32>,
    %24 = vector.extract_strided_slice %1 {offsets = [0, 0], sizes = [4, 255], strides = [1, 1]} : vector<4x256xf32> to vector<4x255xf32>
    %25 = vector.extract_strided_slice %2 {offsets = [3, 1], sizes = [1, 255], strides = [1, 1]} : vector<9x256xf32> to vector<1x255xf32>
    %26 = vector.broadcast %25 : vector<1x255xf32> to vector<4x255xf32>
    %27 = arith.mulf %24, %26 : vector<4x255xf32>
    %c12 = arith.constant 12 : index
    %c1 = arith.constant 1 : index
    %28 = vector.load %arg9[%c12, %c1] : memref<36x256xf32, #tpu.memory_space<vmem>>, vector<4x255xf32>
    tpu.vector_store %arg9[%c12, %c1], %27 {strides = array<i32>} : memref<36x256xf32, #tpu.memory_space<vmem>>, vector<4x255xf32>,
    %cst_13 = arith.constant 0.000000e+00 : f32
    %29 = vector.broadcast %cst_13 : f32 to vector<4x1xf32>
    %c12_14 = arith.constant 12 : index
    %c0_15 = arith.constant 0 : index
    %30 = vector.load %arg9[%c12_14, %c0_15] : memref<36x256xf32, #tpu.memory_space<vmem>>, vector<4x1xf32>
    tpu.vector_store %arg9[%c12_14, %c0_15], %29 {strides = array<i32>} : memref<36x256xf32, #tpu.memory_space<vmem>>, vector<4x1xf32>,
    %31 = vector.extract_strided_slice %2 {offsets = [4, 0], sizes = [1, 256], strides = [1, 1]} : vector<9x256xf32> to vector<1x256xf32>
    %32 = vector.broadcast %31 : vector<1x256xf32> to vector<4x256xf32>
    %33 = arith.mulf %1, %32 : vector<4x256xf32>
    %c16_16 = arith.constant 16 : index
    %c0_17 = arith.constant 0 : index
    %34 = vector.load %arg9[%c16_16, %c0_17] : memref<36x256xf32, #tpu.memory_space<vmem>>, vector<4x256xf32>
    tpu.vector_store %arg9[%c16_16, %c0_17], %33 {strides = array<i32>} : memref<36x256xf32, #tpu.memory_space<vmem>>, vector<4x256xf32>,
    %35 = vector.extract_strided_slice %1 {offsets = [0, 1], sizes = [4, 255], strides = [1, 1]} : vector<4x256xf32> to vector<4x255xf32>
    %36 = vector.extract_strided_slice %2 {offsets = [5, 0], sizes = [1, 255], strides = [1, 1]} : vector<9x256xf32> to vector<1x255xf32>
    %37 = vector.broadcast %36 : vector<1x255xf32> to vector<4x255xf32>
    %38 = arith.mulf %35, %37 : vector<4x255xf32>
    %c20 = arith.constant 20 : index
    %c0_18 = arith.constant 0 : index
    %39 = vector.load %arg9[%c20, %c0_18] : memref<36x256xf32, #tpu.memory_space<vmem>>, vector<4x255xf32>
    tpu.vector_store %arg9[%c20, %c0_18], %38 {strides = array<i32>} : memref<36x256xf32, #tpu.memory_space<vmem>>, vector<4x255xf32>,
    %cst_19 = arith.constant 0.000000e+00 : f32
    %40 = vector.broadcast %cst_19 : f32 to vector<4x1xf32>
    %c20_20 = arith.constant 20 : index
    %c255 = arith.constant 255 : index
    %41 = vector.load %arg9[%c20_20, %c255] : memref<36x256xf32, #tpu.memory_space<vmem>>, vector<4x1xf32>
    tpu.vector_store %arg9[%c20_20, %c255], %40 {strides = array<i32>} : memref<36x256xf32, #tpu.memory_space<vmem>>, vector<4x1xf32>,
    %42 = vector.extract_strided_slice %1 {offsets = [0, 15], sizes = [4, 241], strides = [1, 1]} : vector<4x256xf32> to vector<4x241xf32>
    %43 = vector.extract_strided_slice %2 {offsets = [6, 0], sizes = [1, 241], strides = [1, 1]} : vector<9x256xf32> to vector<1x241xf32>
    %44 = vector.broadcast %43 : vector<1x241xf32> to vector<4x241xf32>
    %45 = arith.mulf %42, %44 : vector<4x241xf32>
    %c24 = arith.constant 24 : index
    %c0_21 = arith.constant 0 : index
    %46 = vector.load %arg9[%c24, %c0_21] : memref<36x256xf32, #tpu.memory_space<vmem>>, vector<4x241xf32>
    tpu.vector_store %arg9[%c24, %c0_21], %45 {strides = array<i32>} : memref<36x256xf32, #tpu.memory_space<vmem>>, vector<4x241xf32>,
    %cst_22 = arith.constant 0.000000e+00 : f32
    %47 = vector.broadcast %cst_22 : f32 to vector<4x15xf32>
    %c24_23 = arith.constant 24 : index
    %c241 = arith.constant 241 : index
    %48 = vector.load %arg9[%c24_23, %c241] : memref<36x256xf32, #tpu.memory_space<vmem>>, vector<4x15xf32>
    tpu.vector_store %arg9[%c24_23, %c241], %47 {strides = array<i32>} : memref<36x256xf32, #tpu.memory_space<vmem>>, vector<4x15xf32>,
    %49 = vector.extract_strided_slice %1 {offsets = [0, 16], sizes = [4, 240], strides = [1, 1]} : vector<4x256xf32> to vector<4x240xf32>
    %50 = vector.extract_strided_slice %2 {offsets = [7, 0], sizes = [1, 240], strides = [1, 1]} : vector<9x256xf32> to vector<1x240xf32>
    %51 = vector.broadcast %50 : vector<1x240xf32> to vector<4x240xf32>
    %52 = arith.mulf %49, %51 : vector<4x240xf32>
    %c28 = arith.constant 28 : index
    %c0_24 = arith.constant 0 : index
    %53 = vector.load %arg9[%c28, %c0_24] : memref<36x256xf32, #tpu.memory_space<vmem>>, vector<4x240xf32>
    tpu.vector_store %arg9[%c28, %c0_24], %52 {strides = array<i32>} : memref<36x256xf32, #tpu.memory_space<vmem>>, vector<4x240xf32>,
    %cst_25 = arith.constant 0.000000e+00 : f32
    %54 = vector.broadcast %cst_25 : f32 to vector<4x16xf32>
    %c28_26 = arith.constant 28 : index
    %c240 = arith.constant 240 : index
    %55 = vector.load %arg9[%c28_26, %c240] : memref<36x256xf32, #tpu.memory_space<vmem>>, vector<4x16xf32>
    tpu.vector_store %arg9[%c28_26, %c240], %54 {strides = array<i32>} : memref<36x256xf32, #tpu.memory_space<vmem>>, vector<4x16xf32>,
    %56 = vector.extract_strided_slice %1 {offsets = [0, 17], sizes = [4, 239], strides = [1, 1]} : vector<4x256xf32> to vector<4x239xf32>
    %57 = vector.extract_strided_slice %2 {offsets = [8, 0], sizes = [1, 239], strides = [1, 1]} : vector<9x256xf32> to vector<1x239xf32>
    %58 = vector.broadcast %57 : vector<1x239xf32> to vector<4x239xf32>
    %59 = arith.mulf %56, %58 : vector<4x239xf32>
    %c32 = arith.constant 32 : index
    %c0_27 = arith.constant 0 : index
    %60 = vector.load %arg9[%c32, %c0_27] : memref<36x256xf32, #tpu.memory_space<vmem>>, vector<4x239xf32>
    tpu.vector_store %arg9[%c32, %c0_27], %59 {strides = array<i32>} : memref<36x256xf32, #tpu.memory_space<vmem>>, vector<4x239xf32>,
    %cst_28 = arith.constant 0.000000e+00 : f32
    %61 = vector.broadcast %cst_28 : f32 to vector<4x17xf32>
    %c32_29 = arith.constant 32 : index
    %c239 = arith.constant 239 : index
    %62 = vector.load %arg9[%c32_29, %c239] : memref<36x256xf32, #tpu.memory_space<vmem>>, vector<4x17xf32>
    tpu.vector_store %arg9[%c32_29, %c239], %61 {strides = array<i32>} : memref<36x256xf32, #tpu.memory_space<vmem>>, vector<4x17xf32>,
    %c0_30 = arith.constant 0 : index
    %c0_31 = arith.constant 0 : index
    %63 = vector.load %arg3[%c0_30, %c0_31] : memref<8x36xf32, #tpu.memory_space<vmem>>, vector<8x36xf32>
    %c0_32 = arith.constant 0 : index
    %c0_33 = arith.constant 0 : index
    %64 = vector.load %arg9[%c0_32, %c0_33] : memref<36x256xf32, #tpu.memory_space<vmem>>, vector<36x256xf32>
    %cst_34 = arith.constant dense<0.000000e+00> : vector<8x256xf32>
    %65 = tpu.matmul %63, %64, %cst_34 {dimension_numbers = #tpu.dot_dimension_numbers<[1], [0], [0], [1], [0, 0, 1, 1], [], []>} : vector<8x36xf32>, vector<36x256xf32>, vector<8x256xf32> -> vector<8x256xf32>
    %c0_35 = arith.constant 0 : index
    %c0_36 = arith.constant 0 : index
    %66 = vector.load %arg4[%c0_35, %c0_36] : memref<8x1xf32, #tpu.memory_space<vmem>>, vector<8x1xf32>
    %67 = vector.broadcast %66 : vector<8x1xf32> to vector<8x256xf32>
    %68 = arith.addf %65, %67 : vector<8x256xf32>
    %c0_37 = arith.constant 0 : index
    %c0_38 = arith.constant 0 : index
    %c0_39 = arith.constant 0 : index
    %69 = vector.load %arg6[%c0_37, %c0_38, %c0_39] : memref<1x8x256xf32, #tpu.memory_space<vmem>>, vector<1x8x256xf32>
    %70 = vector.shape_cast %69 : vector<1x8x256xf32> to vector<8x256xf32>
    %71 = vector.shape_cast %68 : vector<8x256xf32> to vector<1x8x256xf32>
    tpu.vector_store %arg6[%c0_37, %c0_38, %c0_39], %71 {strides = array<i32>} : memref<1x8x256xf32, #tpu.memory_space<vmem>>, vector<1x8x256xf32>,
    %c0_i32 = arith.constant 0 : i32
    %72 = arith.cmpi eq, %arg1, %c0_i32 : i32
    %73 = arith.extui %72 : i1 to i32
    %c0_i32_40 = arith.constant 0 : i32
    %74 = arith.cmpi ne, %73, %c0_i32_40 : i32
    scf.if %74 {
      %cst_55 = arith.constant 0.000000e+00 : f32
      %92 = vector.broadcast %cst_55 : f32 to vector<1x8x1xf32>
      %c0_56 = arith.constant 0 : index
      %c0_57 = arith.constant 0 : index
      %c0_58 = arith.constant 0 : index
      %93 = vector.load %arg7[%c0_56, %c0_57, %c0_58] : memref<1x8x1xf32, #tpu.memory_space<vmem>>, vector<1x8x1xf32>
      tpu.vector_store %arg7[%c0_56, %c0_57, %c0_58], %92 {strides = array<i32>} : memref<1x8x1xf32, #tpu.memory_space<vmem>>, vector<1x8x1xf32>,
      %cst_59 = arith.constant 0.000000e+00 : f32
      %94 = vector.broadcast %cst_59 : f32 to vector<1x8x1xf32>
      %c0_60 = arith.constant 0 : index
      %c0_61 = arith.constant 0 : index
      %c0_62 = arith.constant 0 : index
      %95 = vector.load %arg8[%c0_60, %c0_61, %c0_62] : memref<1x8x1xf32, #tpu.memory_space<vmem>>, vector<1x8x1xf32>
      tpu.vector_store %arg8[%c0_60, %c0_61, %c0_62], %94 {strides = array<i32>} : memref<1x8x1xf32, #tpu.memory_space<vmem>>, vector<1x8x1xf32>,
    } else {
    }
    %c0_41 = arith.constant 0 : index
    %c0_42 = arith.constant 0 : index
    %c0_43 = arith.constant 0 : index
    %75 = vector.load %arg7[%c0_41, %c0_42, %c0_43] : memref<1x8x1xf32, #tpu.memory_space<vmem>>, vector<1x8x1xf32>
    %76 = vector.shape_cast %75 : vector<1x8x1xf32> to vector<8x1xf32>
    %cst_44 = arith.constant dense<0.000000e+00> : vector<8xf32>
    %77 = vector.multi_reduction <add>, %68, %cst_44 [1] : vector<8x256xf32> to vector<8xf32>
    %78 = vector.shape_cast %77 : vector<8xf32> to vector<8x1xf32>
    %79 = arith.addf %76, %78 : vector<8x1xf32>
    %c0_45 = arith.constant 0 : index
    %c0_46 = arith.constant 0 : index
    %c0_47 = arith.constant 0 : index
    %80 = vector.load %arg7[%c0_45, %c0_46, %c0_47] : memref<1x8x1xf32, #tpu.memory_space<vmem>>, vector<1x8x1xf32>
    %81 = vector.shape_cast %80 : vector<1x8x1xf32> to vector<8x1xf32>
    %82 = vector.shape_cast %79 : vector<8x1xf32> to vector<1x8x1xf32>
    tpu.vector_store %arg7[%c0_45, %c0_46, %c0_47], %82 {strides = array<i32>} : memref<1x8x1xf32, #tpu.memory_space<vmem>>, vector<1x8x1xf32>,
    %c0_48 = arith.constant 0 : index
    %c0_49 = arith.constant 0 : index
    %c0_50 = arith.constant 0 : index
    %83 = vector.load %arg8[%c0_48, %c0_49, %c0_50] : memref<1x8x1xf32, #tpu.memory_space<vmem>>, vector<1x8x1xf32>
    %84 = vector.shape_cast %83 : vector<1x8x1xf32> to vector<8x1xf32>
    %85 = arith.mulf %68, %68 : vector<8x256xf32>
    %cst_51 = arith.constant dense<0.000000e+00> : vector<8xf32>
    %86 = vector.multi_reduction <add>, %85, %cst_51 [1] : vector<8x256xf32> to vector<8xf32>
    %87 = vector.shape_cast %86 : vector<8xf32> to vector<8x1xf32>
    %88 = arith.addf %84, %87 : vector<8x1xf32>
    %c0_52 = arith.constant 0 : index
    %c0_53 = arith.constant 0 : index
    %c0_54 = arith.constant 0 : index
    %89 = vector.load %arg8[%c0_52, %c0_53, %c0_54] : memref<1x8x1xf32, #tpu.memory_space<vmem>>, vector<1x8x1xf32>
    %90 = vector.shape_cast %89 : vector<1x8x1xf32> to vector<8x1xf32>
    %91 = vector.shape_cast %88 : vector<8x1xf32> to vector<1x8x1xf32>
    tpu.vector_store %arg8[%c0_52, %c0_53, %c0_54], %91 {strides = array<i32>} : memref<1x8x1xf32, #tpu.memory_space<vmem>>, vector<1x8x1xf32>,
    return
  }
  func.func @transform_0(%arg0: i32, %arg1: i32) -> (i32, i32, i32) {
    %c1_i32 = arith.constant 1 : i32
    %0 = arith.muli %arg0, %c1_i32 : i32
    %1 = arith.addi %0, %arg1 : i32
    %c0_i32 = arith.constant 0 : i32
    %c0_i32_0 = arith.constant 0 : i32
    %c0_i32_1 = arith.constant 0 : i32
    return %1, %c0_i32, %c0_i32_0 : i32, i32, i32
  }
  func.func @transform_1(%arg0: i32, %arg1: i32) -> (i32, i32) {
    %c0_i32 = arith.constant 0 : i32
    %c0_i32_0 = arith.constant 0 : i32
    %c0_i32_1 = arith.constant 0 : i32
    return %c0_i32, %c0_i32_0 : i32, i32
  }
  func.func @transform_2(%arg0: i32, %arg1: i32) -> (i32, i32) {
    %c0_i32 = arith.constant 0 : i32
    %c0_i32_0 = arith.constant 0 : i32
    %c0_i32_1 = arith.constant 0 : i32
    return %c0_i32, %c0_i32_0 : i32, i32
  }
  func.func @transform_3(%arg0: i32, %arg1: i32) -> (i32, i32) {
    %c0_i32 = arith.constant 0 : i32
    %c0_i32_0 = arith.constant 0 : i32
    %c0_i32_1 = arith.constant 0 : i32
    return %c0_i32, %c0_i32_0 : i32, i32
  }
  func.func @transform_4(%arg0: i32, %arg1: i32) -> (i32, i32, i32) {
    %c1_i32 = arith.constant 1 : i32
    %0 = arith.muli %arg0, %c1_i32 : i32
    %1 = arith.addi %0, %arg1 : i32
    %c0_i32 = arith.constant 0 : i32
    %c0_i32_0 = arith.constant 0 : i32
    %c0_i32_1 = arith.constant 0 : i32
    return %1, %c0_i32, %c0_i32_0 : i32, i32, i32
  }
  func.func @transform_5(%arg0: i32, %arg1: i32) -> (i32, i32, i32) {
    %c0_i32 = arith.constant 0 : i32
    %c0_i32_0 = arith.constant 0 : i32
    %c0_i32_1 = arith.constant 0 : i32
    return %arg0, %c0_i32, %c0_i32_0 : i32, i32, i32
  }
  func.func @transform_6(%arg0: i32, %arg1: i32) -> (i32, i32, i32) {
    %c0_i32 = arith.constant 0 : i32
    %c0_i32_0 = arith.constant 0 : i32
    %c0_i32_1 = arith.constant 0 : i32
    return %arg0, %c0_i32, %c0_i32_0 : i32, i32, i32
  }
}

</mosaic_0001>

<llo_original>
// kernel: tpu_custom_call.1
$region0: #{tpu_custom_call.1}
  #allocation0 [shape = 'u32[]', space=smem, size = 0x4, offset = 0x4, fixed_abs, tag = 'smem constant byte address 0x4 - core index']
  #allocation1 [shape = 'u32[144,128]{1,0:T(1,128)}', space=vmem, size = 0x12000, scoped, tag = 'internal scratch']
  #allocation2 [shape = 'f32[36,256]{1,0:T(8,128)}', space=vmem, size = 0xa000, scoped, tag = 'scratch operand']
  %s0 = inlined_call_operand.hbm [shape: f32[2,4,256], index: 0, kind: input, shape index: {}]
  %s1 = inlined_call_operand.vmem [shape: f32[8,36], index: 1, kind: input, shape index: {}]
  %s2 = inlined_call_operand.vmem [shape: f32[8,1], index: 2, kind: input, shape index: {}]
  %s3 = inlined_call_operand.hbm [shape: f32[9,256], index: 3, kind: input, shape index: {}]
  %s4 = inlined_call_operand.hbm [shape: f32[2,8,256], index: 4, kind: output, shape index: {0}]
  %s5 = inlined_call_operand.vmem [shape: f32[2,8,1], index: 5, kind: output, shape index: {1}]
  %s6 = inlined_call_operand.vmem [shape: f32[2,8,1], index: 6, kind: output, shape index: {2}]
  %7 = xla_tuple %s4, %s5, %s6
  %s8 = sld [smem:[#allocation0]]
  $region77: #{tpu_custom_call.1} parent=0
    _
  %s10 = ssub.s32 1, %s8
  %s11 = scalar_select 0, %s10, %s8
  $region1: #{tpu_custom_call.1} parent=0
    #allocation3 [shape = 'u8[8192]{0}', space=vmem, size = 0x2000, scoped, tag = 'input window, operand 0']
    #allocation4 [shape = 's32[2]{0}', space=sflag, size = 0x8, scoped, tag = 'scoped memory for tpu_custom_call.1']
    #allocation5 [shape = 's32[2]{0}', space=sflag, size = 0x8, scoped, tag = 'scoped memory for tpu_custom_call.1']
    #allocation6 [shape = 'u8[16384]{0}', space=vmem, size = 0x4000, scoped, tag = 'input window, operand 3, single buffered']
    #allocation7 [shape = 's32[1]{0}', space=sflag, size = 0x4, scoped, tag = 'scoped memory for tpu_custom_call.1']
    #allocation8 [shape = 'u8[16384]{0}', space=vmem, size = 0x4000, scoped, tag = 'output window, operand 0']
    %12 = vsyncpa [#allocation4], 0
    %s13 = scalar_lea.sflag [#allocation4], 1
    %14 = vsyncpa %s13, 0
    %15 = vsyncpa [#allocation7], 0
    %16 = vsyncpa [#allocation5], 0
    %s17 = scalar_lea.sflag [#allocation5], 1
    %18 = vsyncpa %s17, 0
    loop: start=0, step=1, limit=4
    $region2: #{tpu_custom_call.1} parent=1 // loop_pre_header
      _
    $region3: #{tpu_custom_call.1} parent=1 // loop_header
      %s20 = sphi 0, %s24
      %p21 = scmp.ge.s32.totalorder %s20, 4
      %s27 = sphi 0, %s39
      %s28 = sphi 0, %s35
      %s29 = sphi 0, %s27
      %s30 = sphi 0, %s28
      %s31 = sphi 0, %s29
      %s32 = sphi 0, %s30
      %s44 = sphi 0, %s46
      %s47 = sphi 0, %s44
      %s48 = sphi 0, %s47
      %s64 = sphi 0, %s48
      %s68 = sphi 0, %s68
      %s70 = sphi 0, %s68
      %s71 = sphi 0, %s70
      %s85 = sphi 0, %s71
      %s89 = sphi 0, %s89
      %s91 = sphi 0, %s89
      %s92 = sphi 0, %s91
      %s106 = sphi 0, %s92
      %s110 = sphi 0, %s110
      %s112 = sphi 0, %s110
      %s113 = sphi 0, %s112
      %s127 = sphi 0, %s113
      %s135 = sphi 0, %s137
      %s138 = sphi 0, %s135
      %s139 = sphi 0, %s138
      %s155 = sphi 0, %s139
      %s161 = sphi 0, %s163
      %s164 = sphi 0, %s161
      %s165 = sphi 0, %s164
      %s181 = sphi 0, %s165
      %s187 = sphi 0, %s189
      %s190 = sphi 0, %s187
      %s191 = sphi 0, %s190
      %s207 = sphi 0, %s191
    $region4: #{tpu_custom_call.1} parent=1 // loop_header_branch
      %23 = sbr.rel (%p21) target = $region8
    $region5: #{tpu_custom_call.1} parent=1 // loop_body
      %s25 = ssub.s32 %s20, 1
      %s26 = ssub.s32 %s20, 2
      %s33 = sadd.s32 1, %s28
      %p34 = scmp.ge.s32.totalorder %s33, 1
      %s35 = scalar_select %p34, 0, %s33
      %s36 = sadd.s32 1, %s27
      %s37 = scalar_select %p34, %s36, %s27
      %p38 = scmp.ge.s32.totalorder %s37, 2
      %s39 = scalar_select %p38, 0, %s37
      %s40 = sadd.s32 %s27, %s28
      %s41 = sadd.s32 %s39, %s35
      %s42 = ssub.s32 %s40, %s41
      %p43 = scmp.eq.s32.totalorder %s42, 0
      %s45 = sadd.s32 %s44, 1
      %s46 = scalar_select %p43, %s44, %s45
      %p49 = pneg %p43
      %p50 = scmp.eq.s32.totalorder %s20, 1
      %p51 = por %p49, %p50
      %p52 = scmp.ne.s32.totalorder %s44, %s47
      %p53 = scmp.eq.s32.totalorder %s20, 0
      %p54 = por %p52, %p53
      %p55 = scmp.ne.s32.totalorder %s44, %s47
      %p56 = scmp.eq.s32.totalorder %s25, 1
      %p57 = por %p55, %p56
      %p58 = scmp.ne.s32.totalorder %s47, %s48
      %p59 = scmp.eq.s32.totalorder %s25, 0
      %p60 = por %p58, %p59
      %p61 = scmp.ne.s32.totalorder %s47, %s48
      %p62 = scmp.eq.s32.totalorder %s26, 1
      %p63 = por %p61, %p62
      %p65 = scmp.ne.s32.totalorder %s48, %s64
      %p66 = scmp.eq.s32.totalorder %s26, 0
      %p67 = por %p65, %p66
      %s69 = sadd.s32 %s68, 1
      %p72 = scmp.eq.s32.totalorder %s20, 1
      %p73 = scmp.ne.s32.totalorder %s68, %s70
      %p74 = scmp.eq.s32.totalorder %s20, 0
      %p75 = por %p73, %p74
      %p76 = scmp.ne.s32.totalorder %s68, %s70
      %p77 = scmp.eq.s32.totalorder %s25, 1
      %p78 = por %p76, %p77
      %p79 = scmp.ne.s32.totalorder %s70, %s71
      %p80 = scmp.eq.s32.totalorder %s25, 0
      %p81 = por %p79, %p80
      %p82 = scmp.ne.s32.totalorder %s70, %s71
      %p83 = scmp.eq.s32.totalorder %s26, 1
      %p84 = por %p82, %p83
      %p86 = scmp.ne.s32.totalorder %s71, %s85
      %p87 = scmp.eq.s32.totalorder %s26, 0
      %p88 = por %p86, %p87
      %s90 = sadd.s32 %s89, 1
      %p93 = scmp.eq.s32.totalorder %s20, 1
      %p94 = scmp.ne.s32.totalorder %s89, %s91
      %p95 = scmp.eq.s32.totalorder %s20, 0
      %p96 = por %p94, %p95
      %p97 = scmp.ne.s32.totalorder %s89, %s91
      %p98 = scmp.eq.s32.totalorder %s25, 1
      %p99 = por %p97, %p98
      %p100 = scmp.ne.s32.totalorder %s91, %s92
      %p101 = scmp.eq.s32.totalorder %s25, 0
      %p102 = por %p100, %p101
      %p103 = scmp.ne.s32.totalorder %s91, %s92
      %p104 = scmp.eq.s32.totalorder %s26, 1
      %p105 = por %p103, %p104
      %p107 = scmp.ne.s32.totalorder %s92, %s106
      %p108 = scmp.eq.s32.totalorder %s26, 0
      %p109 = por %p107, %p108
      %s111 = sadd.s32 %s110, 1
      %p114 = scmp.eq.s32.totalorder %s20, 1
      %p115 = scmp.ne.s32.totalorder %s110, %s112
      %p116 = scmp.eq.s32.totalorder %s20, 0
      %p117 = por %p115, %p116
      %p118 = scmp.ne.s32.totalorder %s110, %s112
      %p119 = scmp.eq.s32.totalorder %s25, 1
      %p120 = por %p118, %p119
      %p121 = scmp.ne.s32.totalorder %s112, %s113
      %p122 = scmp.eq.s32.totalorder %s25, 0
      %p123 = por %p121, %p122
      %p124 = scmp.ne.s32.totalorder %s112, %s113
      %p125 = scmp.eq.s32.totalorder %s26, 1
      %p126 = por %p124, %p125
      %p128 = scmp.ne.s32.totalorder %s113, %s127
      %p129 = scmp.eq.s32.totalorder %s26, 0
      %p130 = por %p128, %p129
      %s131 = sadd.s32 %s27, %s28
      %s132 = sadd.s32 %s39, %s35
      %s133 = ssub.s32 %s131, %s132
      %p134 = scmp.eq.s32.totalorder %s133, 0
      %s136 = sadd.s32 %s135, 1
      %s137 = scalar_select %p134, %s135, %s136
      %p140 = pneg %p134
      %p141 = scmp.eq.s32.totalorder %s20, 1
      %p142 = por %p140, %p141
      %p143 = scmp.ne.s32.totalorder %s135, %s138
      %p144 = scmp.eq.s32.totalorder %s20, 0
      %p145 = por %p143, %p144
      %p146 = scmp.ne.s32.totalorder %s135, %s138
      %p147 = scmp.eq.s32.totalorder %s25, 1
      %p148 = por %p146, %p147
      %p149 = scmp.ne.s32.totalorder %s138, %s139
      %p150 = scmp.eq.s32.totalorder %s25, 0
      %p151 = por %p149, %p150
      %p152 = scmp.ne.s32.totalorder %s138, %s139
      %p153 = scmp.eq.s32.totalorder %s26, 1
      %p154 = por %p152, %p153
      %p156 = scmp.ne.s32.totalorder %s139, %s155
      %p157 = scmp.eq.s32.totalorder %s26, 0
      %p158 = por %p156, %p157
      %s159 = ssub.s32 %s27, %s39
      %p160 = scmp.eq.s32.totalorder %s159, 0
      %s162 = sadd.s32 %s161, 1
      %s163 = scalar_select %p160, %s161, %s162
      %p166 = pneg %p160
      %p167 = scmp.eq.s32.totalorder %s20, 1
      %p168 = por %p166, %p167
      %p169 = scmp.ne.s32.totalorder %s161, %s164
      %p170 = scmp.eq.s32.totalorder %s20, 0
      %p171 = por %p169, %p170
      %p172 = scmp.ne.s32.totalorder %s161, %s164
      %p173 = scmp.eq.s32.totalorder %s25, 1
      %p174 = por %p172, %p173
      %p175 = scmp.ne.s32.totalorder %s164, %s165
      %p176 = scmp.eq.s32.totalorder %s25, 0
      %p177 = por %p175, %p176
      %p178 = scmp.ne.s32.totalorder %s164, %s165
      %p179 = scmp.eq.s32.totalorder %s26, 1
      %p180 = por %p178, %p179
      %p182 = scmp.ne.s32.totalorder %s165, %s181
      %p183 = scmp.eq.s32.totalorder %s26, 0
      %p184 = por %p182, %p183
      %s185 = ssub.s32 %s27, %s39
      %p186 = scmp.eq.s32.totalorder %s185, 0
      %s188 = sadd.s32 %s187, 1
      %s189 = scalar_select %p186, %s187, %s188
      %p192 = pneg %p186
      %p193 = scmp.eq.s32.totalorder %s20, 1
      %p194 = por %p192, %p193
      %p195 = scmp.ne.s32.totalorder %s187, %s190
      %p196 = scmp.eq.s32.totalorder %s20, 0
      %p197 = por %p195, %p196
      %p198 = scmp.ne.s32.totalorder %s187, %s190
      %p199 = scmp.eq.s32.totalorder %s25, 1
      %p200 = por %p198, %p199
      %p201 = scmp.ne.s32.totalorder %s190, %s191
      %p202 = scmp.eq.s32.totalorder %s25, 0
      %p203 = por %p201, %p202
      %p204 = scmp.ne.s32.totalorder %s190, %s191
      %p205 = scmp.eq.s32.totalorder %s26, 1
      %p206 = por %p204, %p205
      %p208 = scmp.ne.s32.totalorder %s191, %s207
      %p209 = scmp.eq.s32.totalorder %s26, 0
      %p210 = por %p208, %p209
      %p211 = scmp.le.s32.totalorder 1, %s20
      %p212 = scmp.lt.s32.totalorder %s20, 3
      %p213 = pnand %p211, %p212
      %p214 = pneg %p213
      // Predicated region
      $region9: #{tpu_custom_call.1} parent=5 // pred_check
        _
      $region10: #{tpu_custom_call.1} parent=5 // pred_check_branch
        %216 = sbr.rel (%p213) target = $region12
      $region11: #{tpu_custom_call.1} parent=5 // pred_region
        %s217 = ssub.s32 %s20, 1
        // Predicated region
        $region13: #{tpu_custom_call.1} parent=11 // pred_check
          %p218 = pneg %p81
        $region14: #{tpu_custom_call.1} parent=11 // pred_check_branch
          %220 = sbr.rel (%p218) target = $region16
        $region15: #{tpu_custom_call.1} parent=11 // pred_region
          _
        $region16: #{tpu_custom_call.1} parent=11 // pred_fallthru
          _
        // Predicated region
        $region17: #{tpu_custom_call.1} parent=11 // pred_check
          %p221 = pneg %p102
        $region18: #{tpu_custom_call.1} parent=11 // pred_check_branch
          %223 = sbr.rel (%p221) target = $region20
        $region19: #{tpu_custom_call.1} parent=11 // pred_region
          _
        $region20: #{tpu_custom_call.1} parent=11 // pred_fallthru
          _
        // Predicated region
        $region21: #{tpu_custom_call.1} parent=11 // pred_check
          %p224 = pneg %p123
        $region22: #{tpu_custom_call.1} parent=11 // pred_check_branch
          %226 = sbr.rel (%p224) target = $region24
        $region23: #{tpu_custom_call.1} parent=11 // pred_region
          %s228 = ssub.s32 512, 512
          %229 = vsyncadd [#allocation7], %s228
          %s230 = sshll.u32 [#allocation6], 4
          %s231 = int_to_ptr.vmem [resolvable:$true] %s230
          %236 = dma.hbm_to_vmem [thread:$0]  %s3, 512, %s231, [#allocation7], 256, 256, 16
        $region24: #{tpu_custom_call.1} parent=11 // pred_fallthru
          _
      $region12: #{tpu_custom_call.1} parent=5 // pred_fallthru
        _
      %p237 = scmp.lt.s32.totalorder %s20, 2
      // Predicated region
      $region25: #{tpu_custom_call.1} parent=5 // pred_check
        %p238 = pneg %p237
      $region26: #{tpu_custom_call.1} parent=5 // pred_check_branch
        %240 = sbr.rel (%p238) target = $region28
      $region27: #{tpu_custom_call.1} parent=5 // pred_region
        // Predicated region
        $region29: #{tpu_custom_call.1} parent=27 // pred_check
          %p241 = pneg %p54
        $region30: #{tpu_custom_call.1} parent=27 // pred_check_branch
          %243 = sbr.rel (%p241) target = $region32
        $region31: #{tpu_custom_call.1} parent=27 // pred_region
          %s244 = sand.u32 %s44, 1
          %s245 = scalar_lea.sflag [#allocation4], %s244
          %s246 = sand.u32 %s44, 1
          %s247 = smul.addr %s246, 8
          %s248 = scalar_lea.vmem [#allocation3], %s247
          %s249 = sadd.s32 %s27, %s28
          %s251 = ssub.s32 128, 128
          %252 = vsyncadd %s245, %s251
          %s253 = smul.addr %s249, 2
          %s254 = smul.addr %s253, 64
          %s255 = scalar_lea.hbm %s0, %s254
          %s257 = sshll.u32 %s248, 4
          %s258 = int_to_ptr.vmem [resolvable:$true] %s257
          %260 = dma.hbm_to_vmem [thread:$0]  %s255, 128, %s258, %s245
        $region32: #{tpu_custom_call.1} parent=27 // pred_fallthru
          _
      $region28: #{tpu_custom_call.1} parent=5 // pred_fallthru
        _
      %p261 = scmp.le.s32.totalorder 1, %s20
      %p262 = scmp.lt.s32.totalorder %s20, 3
      %p263 = pnand %p261, %p262
      %p264 = pneg %p263
      // Predicated region
      $region33: #{tpu_custom_call.1} parent=5 // pred_check
        _
      $region34: #{tpu_custom_call.1} parent=5 // pred_check_branch
        %266 = sbr.rel (%p263) target = $region36
      $region35: #{tpu_custom_call.1} parent=5 // pred_region
        %s267 = ssub.s32 %s20, 1
        %s268 = sand.u32 %s47, 1
        %s269 = scalar_lea.sflag [#allocation4], %s268
        %s270 = sand.u32 %s47, 1
        %s271 = smul.addr %s270, 8
        %s272 = scalar_lea.vmem [#allocation3], %s271
        // Predicated region
        $region37: #{tpu_custom_call.1} parent=35 // pred_check
          %p273 = pneg %p60
        $region38: #{tpu_custom_call.1} parent=35 // pred_check_branch
          %275 = sbr.rel (%p273) target = $region40
        $region39: #{tpu_custom_call.1} parent=35 // pred_region
          %276 = dma.done %s269, 128
        $region40: #{tpu_custom_call.1} parent=35 // pred_fallthru
          _
        // Predicated region
        $region41: #{tpu_custom_call.1} parent=35 // pred_check
          %p277 = pneg %p123
        $region42: #{tpu_custom_call.1} parent=35 // pred_check_branch
          %279 = sbr.rel (%p277) target = $region44
        $region43: #{tpu_custom_call.1} parent=35 // pred_region
          %280 = dma.done [#allocation7], 512
        $region44: #{tpu_custom_call.1} parent=35 // pred_fallthru
          _
        %s281 = sand.u32 %s47, 1
        %s282 = scalar_lea.sflag [#allocation4], %s281
        %s283 = sand.u32 %s47, 1
        %s284 = smul.addr %s283, 8
        %s285 = scalar_lea.vmem [#allocation3], %s284
        %p286 = pneg %p60
        %p287 = pneg %p57
        %p288 = pneg %p81
        %p289 = pneg %p78
        %p290 = pneg %p102
        %p291 = pneg %p99
        %p292 = pneg %p123
        %p293 = pneg %p120
        %p294 = pneg %p151
        %p295 = pneg %p148
        %s296 = sand.u32 %s138, 1
        %s297 = scalar_lea.sflag [#allocation5], %s296
        %s298 = sand.u32 %s138, 1
        %s299 = smul.addr %s298, 16
        %s300 = scalar_lea.vmem [#allocation8], %s299
        %p301 = pneg %p177
        %p302 = pneg %p174
        %p303 = scmp.lt.s32.totalorder %s29, 1
        %s304 = scalar_select %p303, %s29, 1
        %s305 = smul.addr %s304, 8
        %s306 = scalar_lea.vmem %s5, %s305
        %p307 = pneg %p203
        %p308 = pneg %p200
        %p309 = scmp.lt.s32.totalorder %s29, 1
        %s310 = scalar_select %p309, %s29, 1
        %s311 = smul.addr %s310, 8
        %s312 = scalar_lea.vmem %s6, %s311
        %s313 = sadd.s32 %s29, %s30
        %s314 = sadd.s32 %s29, %s30
        %p315 = scmp.lt.s32.totalorder %s29, 1
        %s316 = scalar_select %p315, %s29, 1
        %s317 = smul.addr %s316, 8
        %s318 = scalar_lea.vmem %s5, %s317
        %p319 = scmp.lt.s32.totalorder %s29, 1
        %s320 = scalar_select %p319, %s29, 1
        %s321 = smul.addr %s320, 8
        %s322 = scalar_lea.vmem %s6, %s321
        %v323 = vld [vmem:[%s272] sm:$0xff]
        %v324 = vld [vmem:[#allocation6] sm:$0xff]
        %v325 = vld [vmem:[#allocation6 + $0x8] sm:$0xff]
        %v326 = vld [vmem:[#allocation6 + $0x10] sm:$0x1]
        %v327 = vld [vmem:[#allocation6 + $0x18] sm:$0x1]
        %v328 = vlaneseq
        %v329 = vshrl.u32 %v328, 7
        %v330 = vsub.s32 0, %v329
        %v331 = vrot.slane %v324, %v330
        %v332 = vlaneseq
        %v333 = vshrl.u32 %v332, 7
        %v334 = vsub.s32 0, %v333
        %v335 = vrot.slane %v325, %v334
        %v338 = vcombine.low %v331, %v335
        %339 = vrot.lane.b32.xlu0 %v338, 111
        %v340 = vpop.permute.xlu0 %339
        %v341 = vrot.slane %v340, 4
        %vm342 = vcmask 908288
        %v343 = vsel %vm342, %v340, %v341
        %v345 = vmul.f32 %v323, %v343
        %v347 = vcombine.high %v345, %v345
        %348 = vrot.lane.b32.xlu0 %v345, 17
        %v349 = vpop.permute.xlu0 %348
        %350 = vrot.lane.b32.xlu0 %v347, 17
        %v351 = vpop.permute.xlu0 %350
        %vm352 = vcmask 138240
        %v353 = vsel %vm352, %v349, %v351
        %vm356 = vcmask 1043592
        %357 = vst.msk [vmem:[#allocation2] sm:$0xf] %vm356, %v349
        %358 = vst [vmem:[#allocation2 + $0x8] sm:$0xf] %v353
        %vm359 = vcmask 134144
        %360 = vst.msk [vmem:[#allocation2] sm:$0xf] %vm359, 0.0
        %v361 = vlaneseq
        %v362 = vshrl.u32 %v361, 7
        %v363 = vsub.s32 1, %v362
        %v364 = vrot.slane %v324, %v363
        %v365 = vlaneseq
        %v366 = vshrl.u32 %v365, 7
        %v367 = vsub.s32 1, %v366
        %v368 = vrot.slane %v325, %v367
        %v371 = vcombine.low %v364, %v368
        %372 = vrot.lane.b32.xlu0 %v371, 112
        %v373 = vpop.permute.xlu0 %372
        %v374 = vrot.slane %v373, 4
        %vm375 = vcmask 916480
        %v376 = vsel %vm375, %v373, %v374
        %v378 = vmul.f32 %v323, %v376
        %v380 = vcombine.low %v378, %v378
        %381 = vrot.lane.b32.xlu0 %v380, 16
        %v382 = vpop.permute.xlu0 %381
        %383 = vrot.lane.b32.xlu0 %v378, 16
        %v384 = vpop.permute.xlu0 %383
        %vm385 = vcmask 130048
        %v386 = vsel %vm385, %v382, %v384
        %vm389 = vcmask 1047684
        %390 = vst.msk [vmem:[#allocation2] sm:$0xf0] %vm389, %v382
        %391 = vst [vmem:[#allocation2 + $0x8] sm:$0xf0] %v386
        %vm392 = vcmask 130052
        %393 = vst.msk [vmem:[#allocation2] sm:$0xf0] %vm392, 0.0
        %v394 = vlaneseq
        %v395 = vshrl.u32 %v394, 7
        %v396 = vsub.s32 2, %v395
        %v397 = vrot.slane %v324, %v396
        %v398 = vlaneseq
        %v399 = vshrl.u32 %v398, 7
        %v400 = vsub.s32 2, %v399
        %v401 = vrot.slane %v325, %v400
        %v404 = vcombine.low %v397, %v401
        %405 = vrot.lane.b32.xlu0 %v404, 113
        %v406 = vpop.permute.xlu0 %405
        %v407 = vrot.slane %v406, 4
        %vm408 = vcmask 924672
        %v409 = vsel %vm408, %v406, %v407
        %v411 = vmul.f32 %v323, %v409
        %v413 = vcombine.high %v411, %v411
        %414 = vrot.lane.b32.xlu0 %v411, 15
        %v415 = vpop.permute.xlu0 %414
        %416 = vrot.lane.b32.xlu0 %v413, 15
        %v417 = vpop.permute.xlu0 %416
        %vm418 = vcmask 121856
        %v419 = vsel %vm418, %v415, %v417
        %vm422 = vcmask 1043576
        %423 = vst.msk [vmem:[#allocation2 + $0x10] sm:$0xf] %vm422, %v415
        %424 = vst [vmem:[#allocation2 + $0x18] sm:$0xf] %v419
        %vm425 = vcmask 117760
        %426 = vst.msk [vmem:[#allocation2 + $0x10] sm:$0xf] %vm425, 0.0
        %v427 = vlaneseq
        %v428 = vshrl.u32 %v427, 7
        %v429 = vsub.s32 3, %v428
        %v430 = vrot.slane %v324, %v429
        %v431 = vlaneseq
        %v432 = vshrl.u32 %v431, 7
        %v433 = vsub.s32 3, %v432
        %v434 = vrot.slane %v325, %v433
        %v437 = vcombine.low %v430, %v434
        %438 = vrot.lane.b32.xlu0 %v437, 127
        %v439 = vpop.permute.xlu0 %438
        %v440 = vrot.slane %v439, 4
        %vm441 = vcmask 1039360
        %v442 = vsel %vm441, %v439, %v440
        %v444 = vmul.f32 %v323, %v442
        %v446 = vcombine.low %v444, %v444
        %447 = vrot.lane.b32.xlu0 %v446, 1
        %v448 = vpop.permute.xlu0 %447
        %449 = vrot.lane.b32.xlu0 %v444, 1
        %v450 = vpop.permute.xlu0 %449
        %vm451 = vcmask 7168
        %v452 = vsel %vm451, %v448, %v450
        %vm455 = vcmask 1047564
        %456 = vst.msk [vmem:[#allocation2 + $0x10] sm:$0xf0] %vm455, %v448
        %457 = vst [vmem:[#allocation2 + $0x18] sm:$0xf0] %v452
        %vm458 = vcmask 7172
        %459 = vst.msk [vmem:[#allocation2 + $0x10] sm:$0xf0] %vm458, 0.0
        %v460 = vlaneseq
        %v461 = vshrl.u32 %v460, 7
        %v462 = vsub.s32 4, %v461
        %v463 = vrot.slane %v324, %v462
        %v464 = vlaneseq
        %v465 = vshrl.u32 %v464, 7
        %v466 = vsub.s32 4, %v465
        %v467 = vrot.slane %v325, %v466
        %v470 = vcombine.low %v463, %v467
        %v472 = vmul.f32 %v323, %v470
        %v474 = vcombine.high %v472, %v472
        %476 = vst [vmem:[#allocation2 + $0x20] sm:$0xf] %v472
        %477 = vst [vmem:[#allocation2 + $0x28] sm:$0xf] %v474
        %v478 = vlaneseq
        %v479 = vshrl.u32 %v478, 7
        %v480 = vsub.s32 5, %v479
        %v481 = vrot.slane %v324, %v480
        %v482 = vlaneseq
        %v483 = vshrl.u32 %v482, 7
        %v484 = vsub.s32 5, %v483
        %v485 = vrot.slane %v325, %v484
        %v488 = vcombine.low %v481, %v485
        %489 = vrot.lane.b32.xlu0 %v488, 1
        %v490 = vpop.permute.xlu0 %489
        %v491 = vrot.slane %v490, 4
        %v492 = vsel %vm451, %v491, %v490
        %v494 = vmul.f32 %v323, %v492
        %v496 = vcombine.low %v494, %v494
        %497 = vrot.lane.b32.xlu0 %v496, 127
        %v498 = vpop.permute.xlu0 %497
        %499 = vrot.lane.b32.xlu0 %v494, 127
        %v500 = vpop.permute.xlu0 %499
        %v501 = vsel %vm441, %v498, %v500
        %504 = vst [vmem:[#allocation2 + $0x20] sm:$0xf0] %v501
        %vm505 = vcmask 1039364
        %506 = vst.msk [vmem:[#allocation2 + $0x28] sm:$0xf0] %vm505, %v500
        %vm507 = vcmask 1048572
        %508 = vst.msk [vmem:[#allocation2 + $0x28] sm:$0xf0] %vm507, 0.0
        %v509 = vlaneseq
        %v510 = vshrl.u32 %v509, 7
        %v511 = vsub.s32 6, %v510
        %v512 = vrot.slane %v324, %v511
        %v513 = vlaneseq
        %v514 = vshrl.u32 %v513, 7
        %v515 = vsub.s32 6, %v514
        %v516 = vrot.slane %v325, %v515
        %v519 = vcombine.low %v512, %v516
        %520 = vrot.lane.b32.xlu0 %v519, 15
        %v521 = vpop.permute.xlu0 %520
        %v522 = vrot.slane %v521, 4
        %v523 = vsel %vm418, %v522, %v521
        %v525 = vmul.f32 %v323, %v523
        %v527 = vcombine.high %v525, %v525
        %528 = vrot.lane.b32.xlu0 %v525, 113
        %v529 = vpop.permute.xlu0 %528
        %530 = vrot.lane.b32.xlu0 %v527, 113
        %v531 = vpop.permute.xlu0 %530
        %v532 = vsel %vm408, %v529, %v531
        %535 = vst [vmem:[#allocation2 + $0x30] sm:$0xf] %v532
        %vm536 = vcmask 920576
        %537 = vst.msk [vmem:[#allocation2 + $0x38] sm:$0xf] %vm536, %v531
        %vm538 = vcmask 1044360
        %539 = vst.msk [vmem:[#allocation2 + $0x38] sm:$0xf] %vm538, 0.0
        %v540 = vlaneseq
        %v541 = vshrl.u32 %v540, 7
        %v542 = vsub.s32 7, %v541
        %v543 = vrot.slane %v324, %v542
        %v544 = vlaneseq
        %v545 = vshrl.u32 %v544, 7
        %v546 = vsub.s32 7, %v545
        %v547 = vrot.slane %v325, %v546
        %v550 = vcombine.low %v543, %v547
        %551 = vrot.lane.b32.xlu0 %v550, 16
        %v552 = vpop.permute.xlu0 %551
        %v553 = vrot.slane %v552, 4
        %v554 = vsel %vm385, %v553, %v552
        %v556 = vmul.f32 %v323, %v554
        %v558 = vcombine.low %v556, %v556
        %559 = vrot.lane.b32.xlu0 %v558, 112
        %v560 = vpop.permute.xlu0 %559
        %561 = vrot.lane.b32.xlu0 %v556, 112
        %v562 = vpop.permute.xlu0 %561
        %v563 = vsel %vm375, %v560, %v562
        %566 = vst [vmem:[#allocation2 + $0x30] sm:$0xf0] %v563
        %vm567 = vcmask 916484
        %568 = vst.msk [vmem:[#allocation2 + $0x38] sm:$0xf0] %vm567, %v562
        %vm569 = vcmask 1048452
        %570 = vst.msk [vmem:[#allocation2 + $0x38] sm:$0xf0] %vm569, 0.0
        %v571 = vlaneseq
        %v572 = vshrl.u32 %v571, 7
        %v573 = vsub.s32 0, %v572
        %v574 = vrot.slane %v326, %v573
        %v575 = vlaneseq
        %v576 = vshrl.u32 %v575, 7
        %v577 = vsub.s32 0, %v576
        %v578 = vrot.slane %v327, %v577
        %v581 = vcombine.low %v574, %v578
        %582 = vrot.lane.b32.xlu0 %v581, 17
        %v583 = vpop.permute.xlu0 %582
        %v584 = vrot.slane %v583, 4
        %v585 = vsel %vm352, %v584, %v583
        %v587 = vmul.f32 %v323, %v585
        %v589 = vcombine.high %v587, %v587
        %590 = vrot.lane.b32.xlu0 %v587, 111
        %v591 = vpop.permute.xlu0 %590
        %592 = vrot.lane.b32.xlu0 %v589, 111
        %v593 = vpop.permute.xlu0 %592
        %v594 = vsel %vm342, %v591, %v593
        %597 = vst [vmem:[#allocation2 + $0x40] sm:$0xf] %v594
        %vm598 = vcmask 904192
        %599 = vst.msk [vmem:[#allocation2 + $0x48] sm:$0xf] %vm598, %v593
        %vm600 = vcmask 1044344
        %601 = vst.msk [vmem:[#allocation2 + $0x48] sm:$0xf] %vm600, 0.0
        %v602 = vld [vmem:[%s1] sm:$0xff]
        %v603 = vld [vmem:[#allocation2] sm:$0xff]
        %v604 = vld [vmem:[#allocation2 + $0x8] sm:$0xff]
        %v605 = vld [vmem:[#allocation2 + $0x10] sm:$0xff]
        %v606 = vld [vmem:[#allocation2 + $0x18] sm:$0xff]
        %v607 = vld [vmem:[#allocation2 + $0x20] sm:$0xff]
        %v608 = vld [vmem:[#allocation2 + $0x28] sm:$0xff]
        %v609 = vld [vmem:[#allocation2 + $0x30] sm:$0xff]
        %v610 = vld [vmem:[#allocation2 + $0x38] sm:$0xff]
        %v611 = vld [vmem:[#allocation2 + $0x40] sm:$0xf]
        %v612 = vld [vmem:[#allocation2 + $0x48] sm:$0xf]
        %v613 = vld [vmem:[%s2] sm:$0xff]
        %615 = vset.pattern.permute.xlu0 0
        %616 = vperm.xlu0 %615, %v613
        %v617 = vpop.permute.xlu0 %616
        %vm619 = vcmask 293888
        %v621 = vsel %vm619, %v602, 0
        %vm623 = vcmask 1043456
        %v625 = vsel %vm623, %v611, 0
        %v628 = vsel %vm623, %v612, 0
        %630 = vmatprep.subr.mxu0 %v604
        %631 = vmatpush1.msra.mxu0 %v603
        %632 = vmatprep.subr.mxu0 %v606
        %633 = vmatpush1.msra.mxu0 %v605
        %634 = vmatprep.subr.mxu0 %v608
        %635 = vmatpush1.msra.mxu0 %v607
        %636 = vmatprep.subr.mxu0 %v610
        %637 = vmatpush1.msra.mxu0 %v609
        %638 = vmatprep.subr.mxu0 %v628
        %639 = vmatpush1.msra.mxu0 %v625
        %640 = vmatprep.subr.mxu0 0.0
        %641 = vmatpush1.msra.mxu0 0.0
        %642 = vmatprep.subr.mxu0 0.0
        %643 = vmatpush1.msra.mxu0 0.0
        %644 = vmatprep.subr.mxu0 0.0
        %645 = vmatpush1.msra.mxu0 0.0
        %646 = vmatprep.subr.mxu0 0.0
        %647 = vmatpush1.msra.mxu0 0.0
        %648 = vmatprep.subr.mxu0 0.0
        %649 = vmatpush1.msra.mxu0 0.0
        %650 = vmatprep.subr.mxu0 0.0
        %651 = vmatpush1.msra.mxu0 0.0
        %652 = vmatprep.subr.mxu0 0.0
        %653 = vmatpush1.msra.mxu0 0.0
        %654 = vmatprep.subr.mxu0 0.0
        %655 = vmatpush1.msra.mxu0 0.0
        %656 = vmatprep.subr.mxu0 0.0
        %657 = vmatpush1.msra.mxu0 0.0
        %658 = vmatprep.subr.mxu0 0.0
        %659 = vmatpush1.msra.mxu0 0.0
        %660 = vmatprep.subr.mxu0 0.0
        %661 = vmatpush1.msra.mxu0 0.0
        %662 = vmatprep.subr.mxu0 0.0
        %663 = vmatpush1.msra.mxu0 0.0
        %664 = vmatprep.subr.mxu0 0.0
        %665 = vmatpush1.msra.mxu0 0.0
        %666 = vmatprep.subr.mxu0 0.0
        %667 = vmatpush1.msra.mxu0 0.0
        %668 = vmatprep.subr.mxu0 0.0
        %669 = vmatpush1.msra.mxu0 0.0
        %670 = vmatprep.subr.mxu0 0.0
        %671 = vmatpush1.msra.mxu0 0.0
        %672 = vmatprep.subr.mxu0 0.0
        %673 = vmatpush1.msra.mxu0 0.0
        %674 = vmatprep.subr.mxu0 0.0
        %675 = vmatpush1.msra.mxu0 0.0
        %676 = vmatprep.subr.mxu0 0.0
        %677 = vmatpush1.msra.mxu0 0.0
        %678 = vmatprep.subr.mxu0 0.0
        %679 = vmatpush1.msra.mxu0 0.0
        %680 = vmatprep.subr.mxu0 0.0
        %681 = vmatpush1.msra.mxu0 0.0
        %682 = vmatprep.subr.mxu0 0.0
        %683 = vmatpush1.msra.mxu0 0.0
        %684 = vmatprep.subr.mxu0 0.0
        %685 = vmatpush1.msra.mxu0 0.0
        %686 = vmatprep.subr.mxu0 0.0
        %687 = vmatpush1.msra.mxu0 0.0
        %688 = vmatprep.subr.mxu0 0.0
        %689 = vmatpush1.msra.mxu0 0.0
        %690 = vmatprep.subr.mxu0 0.0
        %691 = vmatpush1.msra.mxu0 0.0
        %692 = vmatprep.subr.mxu0 0.0
        %693 = vmatpush1.msra.mxu0 0.0
        %694 = vmatprep.mubr.f32.mxu0 0.0
        %695 = vmatmul.mubr.f32.gmra.mrb[0].mxu0 %v621
        %v696 = vpop.f32.mrb[0].mxu0
        %v697 = vadd.f32 %v617, %v696
        %v698 = vpop.f32.mrb[0].mxu0
        %v699 = vadd.f32 %v617, %v698
        %700 = vdwg.mxu0
        %701 = vst [vmem:[%s300] sm:$0xff] %v697
        %702 = vst [vmem:[%s300 + $0x8] sm:$0xff] %v699
        %p703 = scmp.eq.s32.totalorder %s30, 0
        // Predicated region
        $region45: #{tpu_custom_call.1} parent=35 // pred_check
          %p704 = pneg %p703
        $region46: #{tpu_custom_call.1} parent=35 // pred_check_branch
          %706 = sbr.rel (%p704) target = $region48
        $region47: #{tpu_custom_call.1} parent=35 // pred_region
          %707 = vst.msk [vmem:[%s318] sm:$0xff] %vm451, 0.0
          %708 = vst.msk [vmem:[%s322] sm:$0xff] %vm451, 0.0
        $region48: #{tpu_custom_call.1} parent=35 // pred_fallthru
          _
        %v709 = vld [vmem:[%s318] sm:$0xff]
        %v710 = vadd.f32 %v697, %v699
        %711 = vadd.xlane.f32.xlu0 %v710
        %v712 = vpop.xlane.xlu0 %711
        %v713 = vadd.f32 %v709, %v712
        %714 = vst.msk [vmem:[%s318] sm:$0xff] %vm451, %v713
        %v715 = vld [vmem:[%s322] sm:$0xff]
        %v716 = vmul.f32 %v697, %v697
        %v717 = vmul.f32 %v699, %v699
        %v718 = vadd.f32 %v716, %v717
        %719 = vadd.xlane.f32.xlu0 %v718
        %v720 = vpop.xlane.xlu0 %719
        %v721 = vadd.f32 %v715, %v720
        %722 = vst.msk [vmem:[%s322] sm:$0xff] %vm451, %v721
        %s723 = sand.u32 %s138, 1
        %s724 = scalar_lea.sflag [#allocation5], %s723
        %s725 = sand.u32 %s138, 1
        %s726 = smul.addr %s725, 16
        %s727 = scalar_lea.vmem [#allocation8], %s726
        %p728 = scmp.lt.s32.totalorder %s29, 1
        %s729 = scalar_select %p728, %s29, 1
        %s730 = smul.addr %s729, 8
        %s731 = scalar_lea.vmem %s5, %s730
        %p732 = scmp.lt.s32.totalorder %s29, 1
        %s733 = scalar_select %p732, %s29, 1
        %s734 = smul.addr %s733, 8
        %s735 = scalar_lea.vmem %s6, %s734
        // Predicated region
        $region49: #{tpu_custom_call.1} parent=35 // pred_check
          %p736 = pneg %p148
        $region50: #{tpu_custom_call.1} parent=35 // pred_check_branch
          %738 = sbr.rel (%p736) target = $region52
        $region51: #{tpu_custom_call.1} parent=35 // pred_region
          %s739 = sadd.s32 %s29, %s30
          %s741 = ssub.s32 256, 256
          %742 = vsyncadd %s724, %s741
          %s743 = smul.addr %s739, 2
          %s744 = smul.addr %s743, 128
          %s745 = scalar_lea.hbm %s4, %s744
          %s747 = sshll.u32 %s727, 4
          %s748 = int_to_ptr.vmem [resolvable:$true] %s747
          %750 = dma.vmem_to_hbm [thread:$0]  %s748, 256, %s745, %s724
        $region52: #{tpu_custom_call.1} parent=35 // pred_fallthru
          _
        // Predicated region
        $region53: #{tpu_custom_call.1} parent=35 // pred_check
          %p751 = pneg %p174
        $region54: #{tpu_custom_call.1} parent=35 // pred_check_branch
          %753 = sbr.rel (%p751) target = $region56
        $region55: #{tpu_custom_call.1} parent=35 // pred_region
          _
        $region56: #{tpu_custom_call.1} parent=35 // pred_fallthru
          _
        // Predicated region
        $region57: #{tpu_custom_call.1} parent=35 // pred_check
          %p754 = pneg %p200
        $region58: #{tpu_custom_call.1} parent=35 // pred_check_branch
          %756 = sbr.rel (%p754) target = $region60
        $region59: #{tpu_custom_call.1} parent=35 // pred_region
          _
        $region60: #{tpu_custom_call.1} parent=35 // pred_fallthru
          _
      $region36: #{tpu_custom_call.1} parent=5 // pred_fallthru
        _
      %p757 = scmp.le.s32.totalorder 2, %s20
      // Predicated region
      $region61: #{tpu_custom_call.1} parent=5 // pred_check
        %p758 = pneg %p757
      $region62: #{tpu_custom_call.1} parent=5 // pred_check_branch
        %760 = sbr.rel (%p758) target = $region64
      $region63: #{tpu_custom_call.1} parent=5 // pred_region
        %s761 = ssub.s32 %s20, 2
        // Predicated region
        $region65: #{tpu_custom_call.1} parent=63 // pred_check
          %p762 = pneg %p154
        $region66: #{tpu_custom_call.1} parent=63 // pred_check_branch
          %764 = sbr.rel (%p762) target = $region68
        $region67: #{tpu_custom_call.1} parent=63 // pred_region
          %s765 = sand.u32 %s139, 1
          %s766 = scalar_lea.sflag [#allocation5], %s765
          %s767 = sand.u32 %s139, 1
          %s768 = smul.addr %s767, 16
          %s769 = scalar_lea.vmem [#allocation8], %s768
          %770 = dma.done %s766, 256
        $region68: #{tpu_custom_call.1} parent=63 // pred_fallthru
          _
        // Predicated region
        $region69: #{tpu_custom_call.1} parent=63 // pred_check
          %p771 = pneg %p180
        $region70: #{tpu_custom_call.1} parent=63 // pred_check_branch
          %773 = sbr.rel (%p771) target = $region72
        $region71: #{tpu_custom_call.1} parent=63 // pred_region
          %p774 = scmp.lt.s32.totalorder %s31, 1
          %s775 = scalar_select %p774, %s31, 1
          %s776 = smul.addr %s775, 8
          %s777 = scalar_lea.vmem %s5, %s776
        $region72: #{tpu_custom_call.1} parent=63 // pred_fallthru
          _
        // Predicated region
        $region73: #{tpu_custom_call.1} parent=63 // pred_check
          %p778 = pneg %p206
        $region74: #{tpu_custom_call.1} parent=63 // pred_check_branch
          %780 = sbr.rel (%p778) target = $region76
        $region75: #{tpu_custom_call.1} parent=63 // pred_region
          %p781 = scmp.lt.s32.totalorder %s31, 1
          %s782 = scalar_select %p781, %s31, 1
          %s783 = smul.addr %s782, 8
          %s784 = scalar_lea.vmem %s6, %s783
        $region76: #{tpu_custom_call.1} parent=63 // pred_fallthru
          _
      $region64: #{tpu_custom_call.1} parent=5 // pred_fallthru
        _
    $region6: #{tpu_custom_call.1} parent=1 // loop_footer
      %s24 = sadd.s32 1, %s20
    $region7: #{tpu_custom_call.1} parent=1 // loop_footer_branch
      %19 = sbr.rel target = $region3
    $region8: #{tpu_custom_call.1} parent=1 // loop_exit
      _
    %785 = vsyncpa [#allocation4], 1
    %s786 = scalar_lea.sflag [#allocation4], 1
    %787 = vsyncpa %s786, 1
    %788 = vsyncpa [#allocation7], 1
    %789 = vsyncpa [#allocation5], 1
    %s790 = scalar_lea.sflag [#allocation5], 1
    %791 = vsyncpa %s790, 1

</llo_original>
